<compile_context>
chip_gen: v7x
topology: tpu7x:2x2x1
jax: 0.10.0
libtpu: 0.0.40
codegen_flags: <defaults>
</compile_context>

<pallas_src>
import functools

import jax
import jax.numpy as jnp
import numpy as np
from jax.experimental import pallas as pl
from jax.experimental.pallas import tpu as pltpu


def _round_up(x, m):
    return (x + m - 1) // m * m


def _vmem_limit(footprint_bytes):
    # Generous headroom over the computed double-buffered footprint, capped at
    # v7x's 64 MiB physical VMEM (v5e/v6e have 128 MiB, so the cap is safe
    # there too; the 32 MiB floor lifts v5e's 16 MiB scoped default).
    return int(min(max(2 * footprint_bytes + (2 << 20), 32 << 20), 64 << 20))


def _mish_times(val, g):
    """val * mish(g) in f32.  mish(g) = g * tanh(softplus(g)).

    Single-exp rational form with n = exp(-|g|):
      g >= 0: tanh(softplus(g)) = (1 + 2n) / (1 + 2n + 2n^2)
      g <  0: tanh(softplus(g)) = (2n + n^2) / (2 + 2n + n^2)
    """
    n = jnp.exp(-jnp.abs(g))
    n2 = n * n
    pos = g >= 0.0
    num = jnp.where(pos, 1.0 + 2.0 * n, 2.0 * n + n2)
    den = jnp.where(pos, 1.0 + 2.0 * n + 2.0 * n2, 2.0 + 2.0 * n + n2)
    return val * (g * (num * pl.reciprocal(den, approx=True)))


# ---------------------------------------------------------------------------
# Kernels
# ---------------------------------------------------------------------------

def _self_gate_fused_kernel(x_ref, w_ref, b_ref, o_ref, acc_ref, *, n_half):
    # x_ref: (tm, tk) bf16; w_ref: (tk, 2*n_half) bf16; b_ref: (1, 2*n_half) f32
    # o_ref: (tm, n_half); acc_ref: (tm, 2*n_half) f32 scratch.
    k = pl.program_id(1)

    @pl.when(k == 0)
    def _init():
        acc_ref[...] = jnp.zeros_like(acc_ref)

    acc_ref[...] += jnp.dot(x_ref[...], w_ref[...],
                            preferred_element_type=jnp.float32)

    @pl.when(k == pl.num_programs(1) - 1)
    def _finalize():
        y = acc_ref[...] + b_ref[...]
        val = y[:, :n_half]          # static lane-aligned slices (n_half % 128 == 0)
        g = y[:, n_half:]
        o_ref[...] = _mish_times(val, g).astype(o_ref.dtype)


def _self_gate_split_kernel(x_ref, wv_ref, wg_ref, bv_ref, bg_ref, o_ref,
                            acc_v_ref, acc_g_ref):
    # x_ref: (tm, tk) bf16; wv/wg: (tk, tn) bf16; bv/bg: (1, tn) f32
    # o_ref: (tm, tn); acc_*: (tm, tn) f32 scratch.
    k = pl.program_id(2)

    @pl.when(k == 0)
    def _init():
        acc_v_ref[...] = jnp.zeros_like(acc_v_ref)
        acc_g_ref[...] = jnp.zeros_like(acc_g_ref)

    x = x_ref[...]
    acc_v_ref[...] += jnp.dot(x, wv_ref[...], preferred_element_type=jnp.float32)
    acc_g_ref[...] += jnp.dot(x, wg_ref[...], preferred_element_type=jnp.float32)

    @pl.when(k == pl.num_programs(2) - 1)
    def _finalize():
        val = acc_v_ref[...] + bv_ref[...]
        g = acc_g_ref[...] + bg_ref[...]
        o_ref[...] = _mish_times(val, g).astype(o_ref.dtype)


# ---------------------------------------------------------------------------
# Parameter prep (run once, outside the per-call hot path)
# ---------------------------------------------------------------------------

def prepare_self_gate_params(weight_t, bias, *, tn=512, tk=1024,
                             compute_dtype=jnp.bfloat16):
    """Split the fused Linear weight, zero-pad K/N to tile multiples and cast
    weights to the MXU compute dtype (bf16).  Biases stay in f32 (added to the
    f32 accumulators).

    weight_t: (dim_in, 2*dim_out)  -- transposed nn.Linear weight
    bias:     (2*dim_out,)
    """
    dim_in, two_dout = weight_t.shape
    assert two_dout % 2 == 0
    dim_out = two_dout // 2
    assert tn % 128 == 0 and tk % 128 == 0

    n_lane = _round_up(dim_out, 128)
    tk_eff = min(tk, _round_up(dim_in, 128))
    k_pad = _round_up(dim_in, tk_eff)

    fused = n_lane <= tn            # dim_out fits a single lane-aligned N tile
    tn_eff = n_lane if fused else tn
    n_pad = n_lane if fused else _round_up(dim_out, tn_eff)

    w_val = weight_t[:, :dim_out]
    w_gate = weight_t[:, dim_out:]
    b_val = bias[:dim_out].reshape(1, dim_out).astype(jnp.float32)
    b_gate = bias[dim_out:].reshape(1, dim_out).astype(jnp.float32)

    pk, pn = k_pad - dim_in, n_pad - dim_out
    if pk or pn:
        w_val = jnp.pad(w_val, ((0, pk), (0, pn)))
        w_gate = jnp.pad(w_gate, ((0, pk), (0, pn)))
        b_val = jnp.pad(b_val, ((0, 0), (0, pn)))
        b_gate = jnp.pad(b_gate, ((0, 0), (0, pn)))
    w_val = w_val.astype(compute_dtype)
    w_gate = w_gate.astype(compute_dtype)

    params = dict(dim_in=dim_in, dim_out=dim_out, k_pad=k_pad, n_pad=n_pad,
                  tk=tk_eff, tn=tn_eff, fused=fused,
                  compute_dtype=jnp.dtype(compute_dtype))
    if fused:
        params["w"] = jnp.concatenate([w_val, w_gate], axis=1)   # (k_pad, 2*n_pad)
        params["b"] = jnp.concatenate([b_val, b_gate], axis=1)   # (1, 2*n_pad)
    else:
        params.update(w_val=w_val, w_gate=w_gate, b_val=b_val, b_gate=b_gate)
    return params


# ---------------------------------------------------------------------------
# Forward wrapper
# ---------------------------------------------------------------------------

def self_gate(x, params, *, tm=512):
    """SelfGate forward: x (..., dim_in) -> (..., dim_out)."""
    lead = x.shape[:-1]
    dim_in = x.shape[-1]
    assert dim_in == params["dim_in"]
    dim_out = params["dim_out"]
    k_pad, n_pad = params["k_pad"], params["n_pad"]
    tk, tn = params["tk"], params["tn"]
    compute_dtype = params["compute_dtype"]
    out_dtype = x.dtype

    M = int(np.prod(lead)) if lead else 1
    c_item = compute_dtype.itemsize
    o_item = jnp.dtype(out_dtype).itemsize
    # TODO(synk): min-sublane table only covers f32 (8) and bf16/f16 (16);
    # int8/fp8 inputs would need 32-row sublane tiles.
    min_sub = 8 if c_item >= 4 else 16
    tm_eff = min(tm, _round_up(M, min_sub))
    m_pad = _round_up(M, tm_eff)

    x2d = x.reshape(M, dim_in).astype(compute_dtype)
    if (m_pad, k_pad) != (M, dim_in):
        x2d = jnp.pad(x2d, ((0, m_pad - M), (0, k_pad - dim_in)))

    gm, gk = m_pad // tm_eff, k_pad // tk
    flops = 4 * M * dim_in * dim_out

    if params["fused"]:
        two_n = 2 * n_pad
        footprint = (2 * (tm_eff * tk * c_item + tk * two_n * c_item
                          + two_n * 4 + tm_eff * n_pad * o_item)
                     + tm_eff * two_n * 4)
        cost = pl.CostEstimate(
            flops=flops,
            transcendentals=M * dim_out,
            bytes_accessed=(m_pad * k_pad * c_item
                            + gm * k_pad * two_n * c_item
                            + m_pad * n_pad * o_item),
        )
        out2d = pl.pallas_call(
            functools.partial(_self_gate_fused_kernel, n_half=n_pad),
            out_shape=jax.ShapeDtypeStruct((m_pad, n_pad), out_dtype),
            grid_spec=pltpu.PrefetchScalarGridSpec(
                num_scalar_prefetch=0,
                grid=(gm, gk),
                in_specs=[
                    pl.BlockSpec((tm_eff, tk), lambda i, k: (i, k)),   # x
                    pl.BlockSpec((tk, two_n), lambda i, k: (k, 0)),    # [W_val|W_gate]
                    pl.BlockSpec((1, two_n), lambda i, k: (0, 0)),     # [b_val|b_gate]
                ],
                out_specs=pl.BlockSpec((tm_eff, n_pad), lambda i, k: (i, 0)),
                scratch_shapes=[pltpu.VMEM((tm_eff, two_n), jnp.float32)],
            ),
            compiler_params=pltpu.CompilerParams(
                dimension_semantics=("parallel", "arbitrary"),
                vmem_limit_bytes=_vmem_limit(footprint),
            ),
            cost_estimate=cost,
        )(x2d, params["w"], params["b"])
    else:
        gn = n_pad // tn
        # v7x megacore: put the larger parallel extent outermost so both
        # TensorCores get work (neutral on single-TC v5e/v6e).
        swap = gn > gm
        if swap:
            grid = (gn, gm, gk)
            x_map = lambda j, i, k: (i, k)
            w_map = lambda j, i, k: (k, j)
            b_map = lambda j, i, k: (0, j)
            o_map = lambda j, i, k: (i, j)
        else:
            grid = (gm, gn, gk)
            x_map = lambda i, j, k: (i, k)
            w_map = lambda i, j, k: (k, j)
            b_map = lambda i, j, k: (0, j)
            o_map = lambda i, j, k: (i, j)

        footprint = (2 * (tm_eff * tk * c_item + 2 * tk * tn * c_item
                          + 2 * tn * 4 + tm_eff * tn * o_item)
                     + 2 * tm_eff * tn * 4)
        cost = pl.CostEstimate(
            flops=flops,
            transcendentals=M * dim_out,
            bytes_accessed=(gn * m_pad * k_pad * c_item
                            + gm * 2 * k_pad * n_pad * c_item
                            + m_pad * n_pad * o_item),
        )
        out2d = pl.pallas_call(
            _self_gate_split_kernel,
            out_shape=jax.ShapeDtypeStruct((m_pad, n_pad), out_dtype),
            grid_spec=pltpu.PrefetchScalarGridSpec(
                num_scalar_prefetch=0,
                grid=grid,
                in_specs=[
                    pl.BlockSpec((tm_eff, tk), x_map),   # x
                    pl.BlockSpec((tk, tn), w_map),       # W_val
                    pl.BlockSpec((tk, tn), w_map),       # W_gate
                    pl.BlockSpec((1, tn), b_map),        # b_val
                    pl.BlockSpec((1, tn), b_map),        # b_gate
                ],
                out_specs=pl.BlockSpec((tm_eff, tn), o_map),
                scratch_shapes=[pltpu.VMEM((tm_eff, tn), jnp.float32),
                                pltpu.VMEM((tm_eff, tn), jnp.float32)],
            ),
            compiler_params=pltpu.CompilerParams(
                dimension_semantics=("parallel", "parallel", "arbitrary"),
                vmem_limit_bytes=_vmem_limit(footprint),
            ),
            cost_estimate=cost,
        )(x2d, params["w_val"], params["w_gate"], params["b_val"], params["b_gate"])

    return out2d[:M, :dim_out].reshape(*lead, dim_out)


# ---------------------------------------------------------------------------
# Reference & test
# ---------------------------------------------------------------------------

def _reference(x, weight_t, bias, compute_dtype=None):
    xf, wf = x, weight_t
    if compute_dtype is not None:
        # Mimic the kernel's operand precision (bf16 operands, f32 math).
        xf = xf.astype(compute_dtype)
        wf = wf.astype(compute_dtype)
    y = jnp.einsum("...i,io->...o",
                   xf.astype(jnp.float32), wf.astype(jnp.float32)) + bias
    d = y.shape[-1] // 2
    val, gate = y[..., :d], y[..., d:]
    return val * (gate * jnp.tanh(jax.nn.softplus(gate)))


if __name__ == "__main__":
    def run_case(B, S, dim_in, dim_out, tn, tk, key):
        kx, kw, kb = jax.random.split(key, 3)
        x = jax.random.normal(kx, (B, S, dim_in), dtype=jnp.float32)
        # nn.Linear-style init: uniform(-1/sqrt(fan_in), 1/sqrt(fan_in)).
        bound = 1.0 / (dim_in ** 0.5)
        # PyTorch stores (2*dim_out, dim_in); we keep the transposed layout.
        weight_t = jax.random.uniform(kw, (dim_in, 2 * dim_out),
                                      minval=-bound, maxval=bound,
                                      dtype=jnp.float32)
        bias = jax.random.uniform(kb, (2 * dim_out,),
                                  minval=-bound, maxval=bound,
                                  dtype=jnp.float32)

        params = prepare_self_gate_params(weight_t, bias, tn=tn, tk=tk)
        out = jax.block_until_ready(self_gate(x, params))
        assert out.shape == (B, S, dim_out)

        # Tight check vs. a reference using the same bf16 operand precision
        # (only accumulation order + approx reciprocal differ).
        ref_bf16 = _reference(x, weight_t, bias, compute_dtype=jnp.bfloat16)
        err = float(jnp.max(jnp.abs(out - ref_bf16)))
        assert err < 5e-3, err
        # Loose check vs. the full-f32 PyTorch-semantic reference.
        ref_f32 = _reference(x, weight_t, bias)
        err32 = float(jnp.max(jnp.abs(out - ref_f32)))
        assert err32 < 6e-2, err32

    key = jax.random.PRNGKey(0)
    k1, k2 = jax.random.split(key)
    # Fused small-N path (dim_out fits one lane-aligned tile).
    run_case(B=2, S=8, dim_in=32, dim_out=32, tn=512, tk=1024, key=k1)
    # Split 3-D-grid path with swapped megacore ordering (forced small tn).
    run_case(B=2, S=8, dim_in=256, dim_out=256, tn=128, tk=128, key=k2)

    print("KERNEL_OK")
</pallas_src>

<mosaic_0001>
module attributes {stable_mosaic.version = 11 : i64} {
  func.func @_self_gate_fused_kernel(%arg0: i32, %arg1: i32, %arg2: memref<16x128xbf16, #tpu.memory_space<vmem>>, %arg3: memref<128x256xbf16, #tpu.memory_space<vmem>>, %arg4: memref<1x256xf32, #tpu.memory_space<vmem>>, %arg5: memref<16x128xf32, #tpu.memory_space<vmem>>, %arg6: memref<16x256xf32, #tpu.memory_space<vmem>>) attributes {dimension_semantics = [#tpu.dimension_semantics<parallel>, #tpu.dimension_semantics<arbitrary>], iteration_bounds = array<i64: 1, 1>, scalar_prefetch = 0 : i64, scratch_operands = 1 : i64, tpu.core_type = #tpu.core_type<tc>, window_params = [{transform_indices = @transform_0, window_bounds = array<i64: 16, 128>}, {transform_indices = @transform_1, window_bounds = array<i64: 128, 256>}, {pipeline_mode = #tpu.pipeline_mode<synchronous>, transform_indices = @transform_2, window_bounds = array<i64: 1, 256>}, {transform_indices = @transform_3, window_bounds = array<i64: 16, 128>}]} {
    %c0_i32 = arith.constant 0 : i32
    %0 = arith.cmpi eq, %arg1, %c0_i32 : i32
    %1 = arith.extui %0 : i1 to i32
    %c0_i32_0 = arith.constant 0 : i32
    %2 = arith.cmpi ne, %1, %c0_i32_0 : i32
    scf.if %2 {
      %cst_10 = arith.constant 0.000000e+00 : f32
      %12 = vector.broadcast %cst_10 : f32 to vector<16x256xf32>
      %c0_11 = arith.constant 0 : index
      %c0_12 = arith.constant 0 : index
      %13 = vector.load %arg6[%c0_11, %c0_12] : memref<16x256xf32, #tpu.memory_space<vmem>>, vector<16x256xf32>
      tpu.vector_store %arg6[%c0_11, %c0_12], %12 {strides = array<i32>} : memref<16x256xf32, #tpu.memory_space<vmem>>, vector<16x256xf32>,
    } else {
    }
    %c0 = arith.constant 0 : index
    %c0_1 = arith.constant 0 : index
    %3 = vector.load %arg6[%c0, %c0_1] : memref<16x256xf32, #tpu.memory_space<vmem>>, vector<16x256xf32>
    %c0_2 = arith.constant 0 : index
    %c0_3 = arith.constant 0 : index
    %4 = vector.load %arg2[%c0_2, %c0_3] : memref<16x128xbf16, #tpu.memory_space<vmem>>, vector<16x128xbf16>
    %c0_4 = arith.constant 0 : index
    %c0_5 = arith.constant 0 : index
    %5 = vector.load %arg3[%c0_4, %c0_5] : memref<128x256xbf16, #tpu.memory_space<vmem>>, vector<128x256xbf16>
    %cst = arith.constant dense<0.000000e+00> : vector<16x256xf32>
    %6 = tpu.matmul %4, %5, %cst {dimension_numbers = #tpu.dot_dimension_numbers<[1], [0], [0], [1], [0, 0, 1, 1], [], []>} : vector<16x128xbf16>, vector<128x256xbf16>, vector<16x256xf32> -> vector<16x256xf32>
    %7 = arith.addf %3, %6 : vector<16x256xf32>
    %c0_6 = arith.constant 0 : index
    %c0_7 = arith.constant 0 : index
    %8 = vector.load %arg6[%c0_6, %c0_7] : memref<16x256xf32, #tpu.memory_space<vmem>>, vector<16x256xf32>
    tpu.vector_store %arg6[%c0_6, %c0_7], %7 {strides = array<i32>} : memref<16x256xf32, #tpu.memory_space<vmem>>, vector<16x256xf32>,
    %c0_i32_8 = arith.constant 0 : i32
    %9 = arith.cmpi eq, %arg1, %c0_i32_8 : i32
    %10 = arith.extui %9 : i1 to i32
    %c0_i32_9 = arith.constant 0 : i32
    %11 = arith.cmpi ne, %10, %c0_i32_9 : i32
    scf.if %11 {
      %c0_10 = arith.constant 0 : index
      %c0_11 = arith.constant 0 : index
      %12 = vector.load %arg6[%c0_10, %c0_11] : memref<16x256xf32, #tpu.memory_space<vmem>>, vector<16x256xf32>
      %c0_12 = arith.constant 0 : index
      %c0_13 = arith.constant 0 : index
      %13 = vector.load %arg4[%c0_12, %c0_13] : memref<1x256xf32, #tpu.memory_space<vmem>>, vector<1x256xf32>
      %14 = vector.broadcast %13 : vector<1x256xf32> to vector<16x256xf32>
      %15 = arith.addf %12, %14 : vector<16x256xf32>
      %16 = vector.extract_strided_slice %15 {offsets = [0, 0], sizes = [16, 128], strides = [1, 1]} : vector<16x256xf32> to vector<16x128xf32>
      %17 = vector.extract_strided_slice %15 {offsets = [0, 128], sizes = [16, 128], strides = [1, 1]} : vector<16x256xf32> to vector<16x128xf32>
      %18 = math.absf %17 : vector<16x128xf32>
      %cst_14 = arith.constant 0.000000e+00 : f32
      %19 = vector.broadcast %cst_14 : f32 to vector<16x128xf32>
      %20 = arith.subf %19, %18 : vector<16x128xf32>
      %21 = math.exp %20 : vector<16x128xf32>
      %22 = arith.mulf %21, %21 : vector<16x128xf32>
      %cst_15 = arith.constant 0.000000e+00 : f32
      %23 = vector.broadcast %cst_15 : f32 to vector<16x128xf32>
      %24 = arith.cmpf oge, %17, %23 : vector<16x128xf32>
      %cst_16 = arith.constant 2.000000e+00 : f32
      %25 = vector.broadcast %cst_16 : f32 to vector<16x128xf32>
      %26 = arith.mulf %25, %21 : vector<16x128xf32>
      %cst_17 = arith.constant 1.000000e+00 : f32
      %27 = vector.broadcast %cst_17 : f32 to vector<16x128xf32>
      %28 = arith.addf %27, %26 : vector<16x128xf32>
      %cst_18 = arith.constant 2.000000e+00 : f32
      %29 = vector.broadcast %cst_18 : f32 to vector<16x128xf32>
      %30 = arith.mulf %29, %21 : vector<16x128xf32>
      %31 = arith.addf %30, %22 : vector<16x128xf32>
      %32 = arith.select %24, %28, %31 : vector<16x128xi1>, vector<16x128xf32>
      %cst_19 = arith.constant 2.000000e+00 : f32
      %33 = vector.broadcast %cst_19 : f32 to vector<16x128xf32>
      %34 = arith.mulf %33, %21 : vector<16x128xf32>
      %cst_20 = arith.constant 1.000000e+00 : f32
      %35 = vector.broadcast %cst_20 : f32 to vector<16x128xf32>
      %36 = arith.addf %35, %34 : vector<16x128xf32>
      %cst_21 = arith.constant 2.000000e+00 : f32
      %37 = vector.broadcast %cst_21 : f32 to vector<16x128xf32>
      %38 = arith.mulf %37, %22 : vector<16x128xf32>
      %39 = arith.addf %36, %38 : vector<16x128xf32>
      %cst_22 = arith.constant 2.000000e+00 : f32
      %40 = vector.broadcast %cst_22 : f32 to vector<16x128xf32>
      %41 = arith.mulf %40, %21 : vector<16x128xf32>
      %cst_23 = arith.constant 2.000000e+00 : f32
      %42 = vector.broadcast %cst_23 : f32 to vector<16x128xf32>
      %43 = arith.addf %42, %41 : vector<16x128xf32>
      %44 = arith.addf %43, %22 : vector<16x128xf32>
      %45 = arith.select %24, %39, %44 : vector<16x128xi1>, vector<16x128xf32>
      %46 = tpu.reciprocal %45 {approx = true} : vector<16x128xf32> -> vector<16x128xf32>
      %47 = arith.mulf %32, %46 : vector<16x128xf32>
      %48 = arith.mulf %17, %47 : vector<16x128xf32>
      %49 = arith.mulf %16, %48 : vector<16x128xf32>
      %c0_24 = arith.constant 0 : index
      %c0_25 = arith.constant 0 : index
      %50 = vector.load %arg5[%c0_24, %c0_25] : memref<16x128xf32, #tpu.memory_space<vmem>>, vector<16x128xf32>
      tpu.vector_store %arg5[%c0_24, %c0_25], %49 {strides = array<i32>} : memref<16x128xf32, #tpu.memory_space<vmem>>, vector<16x128xf32>,
    } else {
    }
    return
  }
  func.func @transform_0(%arg0: i32, %arg1: i32) -> (i32, i32) {
    %c0_i32 = arith.constant 0 : i32
    return %arg0, %arg1 : i32, i32
  }
  func.func @transform_1(%arg0: i32, %arg1: i32) -> (i32, i32) {
    %c0_i32 = arith.constant 0 : i32
    %c0_i32_0 = arith.constant 0 : i32
    return %arg1, %c0_i32 : i32, i32
  }
  func.func @transform_2(%arg0: i32, %arg1: i32) -> (i32, i32) {
    %c0_i32 = arith.constant 0 : i32
    %c0_i32_0 = arith.constant 0 : i32
    %c0_i32_1 = arith.constant 0 : i32
    return %c0_i32, %c0_i32_0 : i32, i32
  }
  func.func @transform_3(%arg0: i32, %arg1: i32) -> (i32, i32) {
    %c0_i32 = arith.constant 0 : i32
    %c0_i32_0 = arith.constant 0 : i32
    return %arg0, %c0_i32 : i32, i32
  }
}

</mosaic_0001>

<llo_original>
// kernel: tpu_custom_call.1
$region0: #{tpu_custom_call.1}
  #allocation0 [shape = 'u32[]', space=smem, size = 0x4, offset = 0x4, fixed_abs, tag = 'smem constant byte address 0x4 - core index']
  #allocation1 [shape = 'u32[144,128]{1,0:T(1,128)}', space=vmem, size = 0x12000, scoped, tag = 'internal scratch']
  #allocation2 [shape = 'f32[16,256]{1,0:T(8,128)}', space=vmem, size = 0x4000, scoped, tag = 'scratch operand']
  %s0 = inlined_call_operand.hbm [shape: bf16[16,128], index: 0, kind: input, shape index: {}]
  %s1 = inlined_call_operand.hbm [shape: bf16[128,256], index: 1, kind: input, shape index: {}]
  %s2 = inlined_call_operand.vmem [shape: f32[1,256], index: 2, kind: input, shape index: {}]
  %s3 = inlined_call_operand.hbm [shape: f32[16,128], index: 3, kind: output, shape index: {}]
  %s4 = sld [smem:[#allocation0]]
  $region38: #{tpu_custom_call.1} parent=0
    _
  %s6 = ssub.s32 1, %s4
  %s7 = scalar_select 0, %s6, %s4
  $region1: #{tpu_custom_call.1} parent=0
    #allocation3 [shape = 'u8[4096]{0}', space=vmem, size = 0x1000, scoped, tag = 'input window, operand 0, single buffered']
    #allocation4 [shape = 's32[1]{0}', space=sflag, size = 0x4, scoped, tag = 'scoped memory for tpu_custom_call.1']
    #allocation5 [shape = 's32[1]{0}', space=sflag, size = 0x4, scoped, tag = 'scoped memory for tpu_custom_call.1']
    #allocation6 [shape = 'u8[65536]{0}', space=vmem, size = 0x10000, scoped, tag = 'input window, operand 1, single buffered']
    #allocation7 [shape = 's32[1]{0}', space=sflag, size = 0x4, scoped, tag = 'scoped memory for tpu_custom_call.1']
    #allocation8 [shape = 'u8[8192]{0}', space=vmem, size = 0x2000, scoped, tag = 'output window, operand 0, single buffered']
    %8 = vsyncpa [#allocation4], 0
    %9 = vsyncpa [#allocation7], 0
    %10 = vsyncpa [#allocation5], 0
    // Predicated region
    $region2: #{tpu_custom_call.1} parent=1 // pred_check
      _
    $region3: #{tpu_custom_call.1} parent=1 // pred_check_branch
      %12 = sbr.rel (0) target = $region5
    $region4: #{tpu_custom_call.1} parent=1 // pred_region
      %s14 = ssub.s32 128, 128
      %15 = vsyncadd [#allocation4], %s14
      %s16 = sshll.u32 [#allocation3], 4
      %s17 = int_to_ptr.vmem [resolvable:$true] %s16
      %22 = dma.hbm_to_vmem [thread:$0]  %s0, 128, %s17, [#allocation4], 64, 64, 4
    $region5: #{tpu_custom_call.1} parent=1 // pred_fallthru
      _
    // Predicated region
    $region6: #{tpu_custom_call.1} parent=1 // pred_check
      _
    $region7: #{tpu_custom_call.1} parent=1 // pred_check_branch
      %24 = sbr.rel (0) target = $region9
    $region8: #{tpu_custom_call.1} parent=1 // pred_region
      %s26 = ssub.s32 2048, 2048
      %27 = vsyncadd [#allocation7], %s26
      %s28 = sshll.u32 [#allocation6], 4
      %s29 = int_to_ptr.vmem [resolvable:$true] %s28
      %34 = dma.hbm_to_vmem [thread:$0]  %s1, 2048, %s29, [#allocation7], 128, 128, 8
    $region9: #{tpu_custom_call.1} parent=1 // pred_fallthru
      _
    // Predicated region
    $region10: #{tpu_custom_call.1} parent=1 // pred_check
      _
    $region11: #{tpu_custom_call.1} parent=1 // pred_check_branch
      %36 = sbr.rel (0) target = $region13
    $region12: #{tpu_custom_call.1} parent=1 // pred_region
      _
    $region13: #{tpu_custom_call.1} parent=1 // pred_fallthru
      _
    // Predicated region
    $region14: #{tpu_custom_call.1} parent=1 // pred_check
      _
    $region15: #{tpu_custom_call.1} parent=1 // pred_check_branch
      %38 = sbr.rel (0) target = $region17
    $region16: #{tpu_custom_call.1} parent=1 // pred_region
      %39 = dma.done [#allocation4], 128
    $region17: #{tpu_custom_call.1} parent=1 // pred_fallthru
      _
    // Predicated region
    $region18: #{tpu_custom_call.1} parent=1 // pred_check
      _
    $region19: #{tpu_custom_call.1} parent=1 // pred_check_branch
      %41 = sbr.rel (0) target = $region21
    $region20: #{tpu_custom_call.1} parent=1 // pred_region
      %42 = dma.done [#allocation7], 2048
    $region21: #{tpu_custom_call.1} parent=1 // pred_fallthru
      _
    %p44 = scmp.eq.s32.totalorder 0, 0
    // Predicated region
    $region22: #{tpu_custom_call.1} parent=1 // pred_check
      %p45 = pneg %p44
    $region23: #{tpu_custom_call.1} parent=1 // pred_check_branch
      %47 = sbr.rel (%p45) target = $region25
    $region24: #{tpu_custom_call.1} parent=1 // pred_region
      %48 = vst [vmem:[#allocation2] sm:$0xff] 0.0
      %49 = vst [vmem:[#allocation2 + $0x8] sm:$0xff] 0.0
      %50 = vst [vmem:[#allocation2 + $0x10] sm:$0xff] 0.0
      %51 = vst [vmem:[#allocation2 + $0x18] sm:$0xff] 0.0
    $region25: #{tpu_custom_call.1} parent=1 // pred_fallthru
      _
    %v52 = vld [vmem:[#allocation2] sm:$0xff]
    %v53 = vld [vmem:[#allocation2 + $0x8] sm:$0xff]
    %v54 = vld [vmem:[#allocation2 + $0x10] sm:$0xff]
    %v55 = vld [vmem:[#allocation2 + $0x18] sm:$0xff]
    %v56 = vld [vmem:[#allocation3] sm:$0xf]
    %v57 = vld [vmem:[#allocation3 + $0x4] sm:$0xf]
    %v58 = vld [vmem:[#allocation6] sm:$0xff]
    %v59 = vld [vmem:[#allocation6 + $0x8] sm:$0xff]
    %v60 = vld [vmem:[#allocation6 + $0x10] sm:$0xff]
    %v61 = vld [vmem:[#allocation6 + $0x18] sm:$0xff]
    %v62 = vld [vmem:[#allocation6 + $0x20] sm:$0xff]
    %v63 = vld [vmem:[#allocation6 + $0x28] sm:$0xff]
    %v64 = vld [vmem:[#allocation6 + $0x30] sm:$0xff]
    %v65 = vld [vmem:[#allocation6 + $0x38] sm:$0xff]
    %v66 = vld [vmem:[#allocation6 + $0x40] sm:$0xff]
    %v67 = vld [vmem:[#allocation6 + $0x48] sm:$0xff]
    %v68 = vld [vmem:[#allocation6 + $0x50] sm:$0xff]
    %v69 = vld [vmem:[#allocation6 + $0x58] sm:$0xff]
    %v70 = vld [vmem:[#allocation6 + $0x60] sm:$0xff]
    %v71 = vld [vmem:[#allocation6 + $0x68] sm:$0xff]
    %v72 = vld [vmem:[#allocation6 + $0x70] sm:$0xff]
    %v73 = vld [vmem:[#allocation6 + $0x78] sm:$0xff]
    %v76 = vunpack.c.l.b16 %v56
    %v77 = vunpack.c.l.b16 %v57
    %v78 = vpack.c.b16 %v77, %v76
    %v96 = vunpack.c.l.b16 %v58
    %v97 = vunpack.c.h.b16 %v58
    %v98 = vunpack.c.l.b16 %v59
    %v99 = vunpack.c.h.b16 %v59
    %v100 = vunpack.c.l.b16 %v60
    %v101 = vunpack.c.h.b16 %v60
    %v102 = vunpack.c.l.b16 %v61
    %v103 = vunpack.c.h.b16 %v61
    %v104 = vunpack.c.l.b16 %v62
    %v105 = vunpack.c.h.b16 %v62
    %v106 = vunpack.c.l.b16 %v63
    %v107 = vunpack.c.h.b16 %v63
    %v108 = vunpack.c.l.b16 %v64
    %v109 = vunpack.c.h.b16 %v64
    %v110 = vunpack.c.l.b16 %v65
    %v111 = vunpack.c.h.b16 %v65
    %v112 = vunpack.c.l.b16 %v66
    %v113 = vunpack.c.h.b16 %v66
    %v114 = vunpack.c.l.b16 %v67
    %v115 = vunpack.c.h.b16 %v67
    %v116 = vunpack.c.l.b16 %v68
    %v117 = vunpack.c.h.b16 %v68
    %v118 = vunpack.c.l.b16 %v69
    %v119 = vunpack.c.h.b16 %v69
    %v120 = vunpack.c.l.b16 %v70
    %v121 = vunpack.c.h.b16 %v70
    %v122 = vunpack.c.l.b16 %v71
    %v123 = vunpack.c.h.b16 %v71
    %v124 = vunpack.c.l.b16 %v72
    %v125 = vunpack.c.h.b16 %v72
    %v126 = vunpack.c.l.b16 %v73
    %v127 = vunpack.c.h.b16 %v73
    %v128 = vpack.c.b16 %v98, %v96
    %v129 = vpack.c.b16 %v99, %v97
    %v130 = vpack.c.b16 %v102, %v100
    %v131 = vpack.c.b16 %v103, %v101
    %v132 = vpack.c.b16 %v106, %v104
    %v133 = vpack.c.b16 %v107, %v105
    %v134 = vpack.c.b16 %v110, %v108
    %v135 = vpack.c.b16 %v111, %v109
    %v136 = vpack.c.b16 %v114, %v112
    %v137 = vpack.c.b16 %v115, %v113
    %v138 = vpack.c.b16 %v118, %v116
    %v139 = vpack.c.b16 %v119, %v117
    %v140 = vpack.c.b16 %v122, %v120
    %v141 = vpack.c.b16 %v123, %v121
    %v142 = vpack.c.b16 %v126, %v124
    %v143 = vpack.c.b16 %v127, %v125
    %160 = vmatprep.subr.bf16.mxu0 %v129
    %161 = vmatpush1.bf16.msra.mxu0 %v128
    %162 = vmatprep.subr.bf16.mxu0 %v131
    %163 = vmatpush1.bf16.msra.mxu0 %v130
    %164 = vmatprep.subr.bf16.mxu0 %v133
    %165 = vmatpush1.bf16.msra.mxu0 %v132
    %166 = vmatprep.subr.bf16.mxu0 %v135
    %167 = vmatpush1.bf16.msra.mxu0 %v134
    %168 = vmatprep.subr.bf16.mxu0 %v137
    %169 = vmatpush1.bf16.msra.mxu0 %v136
    %170 = vmatprep.subr.bf16.mxu0 %v139
    %171 = vmatpush1.bf16.msra.mxu0 %v138
    %172 = vmatprep.subr.bf16.mxu0 %v141
    %173 = vmatpush1.bf16.msra.mxu0 %v140
    %174 = vmatprep.subr.bf16.mxu0 %v143
    %175 = vmatpush1.bf16.msra.mxu0 %v142
    %176 = vmatprep.subr.bf16.mxu0 0
    %177 = vmatpush1.bf16.msra.mxu0 0
    %178 = vmatprep.subr.bf16.mxu0 0
    %179 = vmatpush1.bf16.msra.mxu0 0
    %180 = vmatprep.subr.bf16.mxu0 0
    %181 = vmatpush1.bf16.msra.mxu0 0
    %182 = vmatprep.subr.bf16.mxu0 0
    %183 = vmatpush1.bf16.msra.mxu0 0
    %184 = vmatprep.subr.bf16.mxu0 0
    %185 = vmatpush1.bf16.msra.mxu0 0
    %186 = vmatprep.subr.bf16.mxu0 0
    %187 = vmatpush1.bf16.msra.mxu0 0
    %188 = vmatprep.subr.bf16.mxu0 0
    %189 = vmatpush1.bf16.msra.mxu0 0
    %190 = vmatprep.subr.bf16.mxu0 0
    %191 = vmatpush1.bf16.msra.mxu0 0
    %192 = vmatprep.mubr.bf16.mxu0 0
    %193 = vmatmul.mubr.bf16.gmra.mrb[0].mxu0 %v78
    %v194 = vpop.f32.mrb[0].mxu0
    %v195 = vadd.f32 0.0, %v194
    %v196 = vpop.f32.mrb[0].mxu0
    %v197 = vadd.f32 0.0, %v196
    %v198 = vpop.f32.mrb[0].mxu0
    %v199 = vadd.f32 0.0, %v198
    %v200 = vpop.f32.mrb[0].mxu0
    %v201 = vadd.f32 0.0, %v200
    %202 = vdwg.mxu0
    %v203 = vadd.f32 %v52, %v195
    %v204 = vadd.f32 %v53, %v197
    %v205 = vadd.f32 %v54, %v199
    %v206 = vadd.f32 %v55, %v201
    %207 = vst [vmem:[#allocation2] sm:$0xff] %v203
    %208 = vst [vmem:[#allocation2 + $0x8] sm:$0xff] %v204
    %209 = vst [vmem:[#allocation2 + $0x10] sm:$0xff] %v205
    %210 = vst [vmem:[#allocation2 + $0x18] sm:$0xff] %v206
    // Predicated region
    $region26: #{tpu_custom_call.1} parent=1 // pred_check
      %p211 = pneg %p44
    $region27: #{tpu_custom_call.1} parent=1 // pred_check_branch
      %213 = sbr.rel (%p211) target = $region29
    $region28: #{tpu_custom_call.1} parent=1 // pred_region
      %v214 = vld [vmem:[#allocation2] sm:$0xff]
      %v215 = vld [vmem:[#allocation2 + $0x8] sm:$0xff]
      %v216 = vld [vmem:[#allocation2 + $0x10] sm:$0xff]
      %v217 = vld [vmem:[#allocation2 + $0x18] sm:$0xff]
      %v218 = vld [vmem:[%s2] sm:$0x3]
      %v220 = vlaneseq
      %v221 = vshrl.u32 %v220, 7
      %v222 = vsub.s32 0, %v221
      %v223 = vrot.slane %v218, %v222
      %v224 = vlaneseq
      %v225 = vshrl.u32 %v224, 7
      %v226 = vsub.s32 1, %v225
      %v227 = vrot.slane %v218, %v226
      %v230 = vadd.f32 %v214, %v223
      %v231 = vadd.f32 %v215, %v227
      %v232 = vadd.f32 %v216, %v223
      %v233 = vadd.f32 %v217, %v227
      %v234 = vand.u32 2147483647, %v231
      %v235 = vand.u32 2147483647, %v233
      %v236 = vsub.f32 0.0, %v234
      %v237 = vsub.f32 0.0, %v235
      %v238 = vmul.f32 %v236, 1.442695
      %v239 = vpow.pop %v238
      %v240 = vmul.f32 %v237, 1.442695
      %v241 = vpow.pop %v240
      %v242 = vmul.f32 %v239, %v239
      %v243 = vmul.f32 %v241, %v241
      %vm244 = vcmp.ge.f32.partialorder %v231, 0.0
      %vm245 = vcmp.ge.f32.partialorder %v233, 0.0
      %v246 = vmul.f32 %v239, 2.0
      %v247 = vmul.f32 %v241, 2.0
      %v248 = vadd.f32 %v246, 1.0
      %v249 = vadd.f32 %v247, 1.0
      %v250 = vadd.f32 %v246, %v242
      %v251 = vadd.f32 %v247, %v243
      %v252 = vsel %vm244, %v248, %v250
      %v253 = vsel %vm245, %v249, %v251
      %v254 = vmul.f32 %v242, 2.0
      %v255 = vmul.f32 %v243, 2.0
      %v256 = vadd.f32 %v248, %v254
      %v257 = vadd.f32 %v249, %v255
      %v258 = vadd.f32 %v246, 2.0
      %v259 = vadd.f32 %v247, 2.0
      %v260 = vadd.f32 %v258, %v242
      %v261 = vadd.f32 %v259, %v243
      %v262 = vsel %vm244, %v256, %v260
      %v263 = vsel %vm245, %v257, %v261
      %v264 = vrcp.pop %v262
      %v265 = vrcp.pop %v263
      %v266 = vmul.f32 %v252, %v264
      %v267 = vmul.f32 %v253, %v265
      %v268 = vmul.f32 %v231, %v266
      %v269 = vmul.f32 %v233, %v267
      %v270 = vmul.f32 %v230, %v268
      %v271 = vmul.f32 %v232, %v269
      %272 = vst [vmem:[#allocation8] sm:$0xff] %v270
      %273 = vst [vmem:[#allocation8 + $0x8] sm:$0xff] %v271
    $region29: #{tpu_custom_call.1} parent=1 // pred_fallthru
      _
    // Predicated region
    $region30: #{tpu_custom_call.1} parent=1 // pred_check
      _
    $region31: #{tpu_custom_call.1} parent=1 // pred_check_branch
      %275 = sbr.rel (0) target = $region33
    $region32: #{tpu_custom_call.1} parent=1 // pred_region
      %s277 = ssub.s32 256, 256
      %278 = vsyncadd [#allocation5], %s277
      %s279 = sshll.u32 [#allocation8], 4
      %s280 = int_to_ptr.vmem [resolvable:$true] %s279
      %285 = dma.vmem_to_hbm [thread:$0]  %s280, 256, %s3, [#allocation5], 128, 128, 8
    $region33: #{tpu_custom_call.1} parent=1 // pred_fallthru
      _
    // Predicated region
    $region34: #{tpu_custom_call.1} parent=1 // pred_check
      _
    $region35: #{tpu_custom_call.1} parent=1 // pred_check_branch
      %287 = sbr.rel (0) target = $region37
    $region36: #{tpu_custom_call.1} parent=1 // pred_region
      %288 = dma.done [#allocation5], 256
    $region37: #{tpu_custom_call.1} parent=1 // pred_fallthru
      _
    %289 = vsyncpa [#allocation4], 1
    %290 = vsyncpa [#allocation7], 1
    %291 = vsyncpa [#allocation5], 1

</llo_original>
